<compile_context>
chip_gen: v5e
topology: v5e:2x2
jax: 0.10.0
libtpu: 0.0.40
codegen_flags: <defaults>
</compile_context>

<pallas_src>
import functools

import jax
import jax.numpy as jnp
from jax.experimental import pallas as pl
from jax.experimental.pallas import tpu as pltpu


def _round_up(x, m):
    return (x + m - 1) // m * m


def _cdiv(a, b):
    return (a + b - 1) // b


def _vmem_capacity_bytes() -> int:
    try:
        return int(pltpu.get_tpu_info().vmem_capacity_bytes)
    except Exception:
        return 128 * 1024 * 1024


@functools.lru_cache(maxsize=None)
def _roll_moves_to_higher_index() -> bool:
    """One-time tiny probe of pltpu.roll's shift convention (np.roll-style or
    reversed) so the kernels always bake in the right static shifts."""
    def k(x_ref, o_ref):
        o_ref[...] = pltpu.roll(x_ref[...], 1, 1)

    x = jnp.arange(8 * 128, dtype=jnp.float32).reshape(8, 128)
    y = pl.pallas_call(k, out_shape=jax.ShapeDtypeStruct((8, 128), jnp.float32))(x)
    return bool(y[0, 1] == x[0, 0])


def _taps_matmul_gelu(x, w, b, ml, mr, out_dtype, roll_to_higher):
    """One sample slab.

    x  : (K, T)       input channels on sublanes, positions on lanes
    w  : (cout_p, 3K) taps stacked on the contraction axis [W2^T | W1^T | W0^T]
    b  : (cout_p, 1)
    ml : (1, T)       0.0 where there is no left  neighbour (pos == 0)
    mr : (1, T)       0.0 where there is no right neighbour (pos == L-1)
    Returns GELU(ConvTranspose1d_k3_p1(x)) of shape (cout_p, T).
    """
    t_dim = x.shape[-1]
    s_fwd = 1 if roll_to_higher else t_dim - 1     # position t receives x[t-1]
    s_bwd = t_dim - 1 if roll_to_higher else 1     # position t receives x[t+1]
    x_lft = pltpu.roll(x, s_fwd, 1) * ml           # x[t-1], zeroed at sample start
    x_rgt = pltpu.roll(x, s_bwd, 1) * mr           # x[t+1], zeroed at sample end
    xs = jnp.concatenate([x_lft, x, x_rgt], axis=0)          # (3K, T)
    # Single MXU matmul, K = 3*C_in_p, f32 accumulation.
    acc = jnp.dot(w, xs, preferred_element_type=jnp.float32) + b
    # Exact (erf) GELU -- matches PyTorch nn.GELU() default.
    y = acc * 0.5 * (1.0 + jax.lax.erf(acc * jnp.float32(0.7071067811865476)))
    return y.astype(out_dtype)


def _direct_kernel(x_ref, w_ref, b_ref, o_ref, *, L, roll_to_higher):
    """Direct path: grid over batch groups, whole (padded) L on lanes.

    x_ref: (nb, cinp, Lp)   o_ref: (nb, cout_p, Lp)
    """
    t_dim = x_ref.shape[-1]
    pos = jax.lax.broadcasted_iota(jnp.int32, (1, t_dim), 1)
    ml = (pos != 0).astype(x_ref.dtype)
    mr = (pos != (L - 1)).astype(x_ref.dtype)
    w = w_ref[...]
    b = b_ref[...]
    for bi in range(x_ref.shape[0]):               # small static unroll (nb <= 8)
        o_ref[bi] = _taps_matmul_gelu(x_ref[bi], w, b, ml, mr,
                                      o_ref.dtype, roll_to_higher)


def _flat_kernel(x_ref, w_ref, b_ref, ml_ref, mr_ref, o_ref, *, roll_to_higher):
    """Tiny-L fallback: nb samples flattened onto the lane axis.

    x_ref: (1, cinp, T)   masks: (1, T)   o_ref: (1, cout_p, T)
    """
    o_ref[0] = _taps_matmul_gelu(x_ref[0], w_ref[...], b_ref[...],
                                 ml_ref[...], mr_ref[...],
                                 o_ref.dtype, roll_to_higher)


def upsample_block(x, weight, bias, *, compute_dtype=None):
    """ConvTranspose1d(k=3, stride=1, padding=1) + exact GELU.

    x      : (N, C_in, L) float32
    weight : (C_in, C_out, 3)   (PyTorch ConvTranspose1d layout)
    bias   : (C_out,)
    compute_dtype : optionally cast x / weights (e.g. jnp.bfloat16) for the
        bf16-native MXU on v6e/v7x; accumulation stays f32.  Default: no cast,
        keeping PyTorch f32 parity.
    """
    N, c_in, L = x.shape
    assert weight.shape[0] == c_in and weight.shape[2] == 3
    c_out = weight.shape[1]

    cdt = jnp.dtype(compute_dtype) if compute_dtype is not None else jnp.dtype(x.dtype)
    ii = cdt.itemsize
    sub = 8 if ii >= 4 else 32 // ii              # sublane packing: 8 f32 / 16 bf16
    cinp = _round_up(c_in, sub)
    cout_p = _round_up(c_out, 8)

    # --- weights / bias: the 3 taps stacked along the contraction axis ---
    # y[n,o,t] = b[o] + sum_c x[n,c,t-1]*W[c,o,2] + x[n,c,t]*W[c,o,1] + x[n,c,t+1]*W[c,o,0]
    wt = jnp.transpose(weight, (2, 1, 0))                       # (3, c_out, c_in)
    wt = jnp.pad(wt, ((0, 0), (0, cout_p - c_out), (0, cinp - c_in)))
    w_stack = jnp.concatenate([wt[2], wt[1], wt[0]], axis=1)    # (cout_p, 3*cinp)
    b_col = jnp.pad(bias, (0, cout_p - c_out)).reshape(cout_p, 1).astype(jnp.float32)

    x_in = x.astype(cdt) if compute_dtype is not None else x
    w_stack = w_stack.astype(cdt)

    # --- generation-aware VMEM budgeting ---
    vmem_cap = _vmem_capacity_bytes()
    small_vmem = vmem_cap <= 72 * 1024 * 1024          # v7x-class (64 MiB / core)
    clamp = (44 if small_vmem else 100) * 1024 * 1024  # v5e/v6e have 128 MiB physical
    budget = int(0.6 * clamp)
    roll_hi = _roll_moves_to_higher_index()

    stream_per_lane = 2 * cinp * ii + 2 * cout_p * 4   # double-buffered x / y streams
    temp_per_lane = 6 * cinp * ii + 4 * cout_p * 4     # roll/concat/matmul temporaries
    w_bytes = 3 * cinp * cout_p * ii + cout_p * 4

    use_direct = L >= 128

    if use_direct:
        # ---------- direct path: grid over batch, only L padded to 128 ----------
        Lp = _round_up(L, 128)
        per_row = stream_per_lane * Lp
        fixed = w_bytes + temp_per_lane * Lp
        nb_fit = max(1, (budget - fixed) // per_row) if budget > fixed else 1
        nb = int(min(N, nb_fit, 8, max(1, 1024 // Lp)))
        if small_vmem and N >= 2:          # keep >= 2 grid steps for the 2 TCs (v7x)
            nb = min(nb, max(1, N // 2))
        g = _cdiv(N, nb)
        n_pad = g * nb

        pads = ((0, n_pad - N), (0, cinp - c_in), (0, Lp - L))
        if any(p[1] for p in pads):
            x_in = jnp.pad(x_in, pads)

        est = (2 * nb * cinp * Lp * ii + 2 * nb * cout_p * Lp * 4
               + w_bytes + temp_per_lane * Lp)
        vmem_limit = int(min(max(2 * est, 16 * 1024 * 1024), clamp))

        kernel = functools.partial(_direct_kernel, L=L, roll_to_higher=roll_hi)
        out = pl.pallas_call(
            kernel,
            out_shape=jax.ShapeDtypeStruct((n_pad, cout_p, Lp), jnp.float32),
            grid_spec=pltpu.PrefetchScalarGridSpec(
                num_scalar_prefetch=0,
                grid=(g,),
                in_specs=[
                    pl.BlockSpec((nb, cinp, Lp), lambda i: (i, 0, 0)),
                    pl.BlockSpec((cout_p, 3 * cinp), lambda i: (0, 0)),
                    pl.BlockSpec((cout_p, 1), lambda i: (0, 0)),
                ],
                out_specs=pl.BlockSpec((nb, cout_p, Lp), lambda i: (i, 0, 0)),
            ),
            compiler_params=pltpu.CompilerParams(
                dimension_semantics=("parallel",),
                vmem_limit_bytes=vmem_limit,
            ),
        )(x_in, w_stack, b_col)

        y = out[:N, :c_out, :L]
        return y.astype(x.dtype)

    # ---------- fallback: tiny L, fold batches onto the lane axis ----------
    lane_budget = max(256, (budget - w_bytes) // (stream_per_lane + temp_per_lane))
    nb = max(1, min(N, min(lane_budget, 4096) // L))
    if small_vmem and N >= 2:
        nb = min(nb, max(1, N // 2))
    g = _cdiv(N, nb)
    n_pad = g * nb
    if n_pad != N:                                   # pad N instead of collapsing nb
        x_in = jnp.pad(x_in, ((0, n_pad - N), (0, 0), (0, 0)))
    t_real = nb * L
    T = _round_up(t_real, 128)

    xg = x_in.reshape(g, nb, c_in, L).transpose(0, 2, 1, 3).reshape(g, c_in, t_real)
    xg = jnp.pad(xg, ((0, 0), (0, cinp - c_in), (0, T - t_real)))

    # Host masks: need pos = lane % L, which is cheaper/safer to build here once.
    idx = jnp.arange(T, dtype=jnp.int32)
    pos = idx % L
    ml = (pos != 0).astype(cdt).reshape(1, T)
    mr = (pos != L - 1).astype(cdt).reshape(1, T)

    est = (2 * cinp * T * ii + 2 * cout_p * T * 4 + w_bytes
           + 2 * T * ii + temp_per_lane * T)
    vmem_limit = int(min(max(2 * est, 16 * 1024 * 1024), clamp))

    kernel = functools.partial(_flat_kernel, roll_to_higher=roll_hi)
    out = pl.pallas_call(
        kernel,
        out_shape=jax.ShapeDtypeStruct((g, cout_p, T), jnp.float32),
        grid_spec=pltpu.PrefetchScalarGridSpec(
            num_scalar_prefetch=0,
            grid=(g,),
            in_specs=[
                pl.BlockSpec((1, cinp, T), lambda i: (i, 0, 0)),
                pl.BlockSpec((cout_p, 3 * cinp), lambda i: (0, 0)),
                pl.BlockSpec((cout_p, 1), lambda i: (0, 0)),
                pl.BlockSpec((1, T), lambda i: (0, 0)),
                pl.BlockSpec((1, T), lambda i: (0, 0)),
            ],
            out_specs=pl.BlockSpec((1, cout_p, T), lambda i: (i, 0, 0)),
        ),
        compiler_params=pltpu.CompilerParams(
            dimension_semantics=("parallel",),
            vmem_limit_bytes=vmem_limit,
        ),
    )(xg, w_stack, b_col, ml, mr)

    y = out[:, :c_out, :t_real]
    y = y.reshape(g, c_out, nb, L).transpose(0, 2, 1, 3).reshape(n_pad, c_out, L)
    return y[:N].astype(x.dtype)


def _reference(x, weight, bias):
    """Pure-JAX (f32-exact, no matmul) reference of ConvTranspose1d(k=3,p=1) + GELU."""
    N, c_in, L = x.shape
    c_out = weight.shape[1]
    x_pad = jnp.pad(x, ((0, 0), (0, 0), (1, 1)))
    y = jnp.zeros((N, c_out, L), dtype=jnp.float32)
    for k in range(3):
        # y[n,o,t] += sum_c x_pad[n,c,t+k] * W[c,o,2-k]
        y = y + jnp.sum(x_pad[:, :, None, k:k + L]
                        * weight[:, :, 2 - k][None, :, :, None], axis=1)
    y = y + bias.reshape(1, c_out, 1)
    return jax.nn.gelu(y, approximate=False)


if __name__ == "__main__":
    key = jax.random.PRNGKey(0)
    k1, k2 = jax.random.split(key)

    def run_case(N, C_IN, C_OUT, L, k):
        kx, kw, kb = jax.random.split(k, 3)
        x = jax.random.normal(kx, (N, C_IN, L), dtype=jnp.float32)
        # ConvTranspose1d weight layout: (in_channel, out_channel, kernel_size)
        weight = jax.random.normal(kw, (C_IN, C_OUT, 3), dtype=jnp.float32) * 0.2
        bias = jax.random.normal(kb, (C_OUT,), dtype=jnp.float32) * 0.5

        y = jax.block_until_ready(upsample_block(x, weight, bias))
        y_ref = _reference(x, weight, bias)
        assert y.shape == (N, C_OUT, L)
        # Tolerance leaves headroom for MXU f32 pass decomposition differences.
        assert jnp.allclose(y, y_ref, atol=5e-3, rtol=5e-3), \
            f"mismatch vs reference for shape {(N, C_IN, C_OUT, L)}"

    # Case 1: tiny L -> flatten-onto-lanes fallback path.
    run_case(2, 4, 8, 16, k1)
    # Case 2: lane-dense L -> direct grid-over-batch path (exercises L / N /
    # channel padding and the output un-pad slice).
    run_case(3, 4, 6, 456, k2)

    print("KERNEL_OK")
</pallas_src>

<mosaic_0001>
module attributes {stable_mosaic.version = 11 : i64} {
  func.func @k(%arg0: memref<8x128xf32, #tpu.memory_space<vmem>>, %arg1: memref<8x128xf32, #tpu.memory_space<vmem>>) attributes {dimension_semantics = [], scalar_prefetch = 0 : i64, scratch_operands = 0 : i64, tpu.core_type = #tpu.core_type<tc>} {
    %c0 = arith.constant 0 : index
    %c0_0 = arith.constant 0 : index
    %0 = vector.load %arg0[%c0, %c0_0] : memref<8x128xf32, #tpu.memory_space<vmem>>, vector<8x128xf32>
    %c1_i32 = arith.constant 1 : i32
    %1 = tpu.dynamic_rotate %0 by %c1_i32 dim 1 : vector<8x128xf32>, i32 -> vector<8x128xf32>
    %c0_1 = arith.constant 0 : index
    %c0_2 = arith.constant 0 : index
    %2 = vector.load %arg1[%c0_1, %c0_2] : memref<8x128xf32, #tpu.memory_space<vmem>>, vector<8x128xf32>
    tpu.vector_store %arg1[%c0_1, %c0_2], %1 {strides = array<i32>} : memref<8x128xf32, #tpu.memory_space<vmem>>, vector<8x128xf32>,
    return
  }
}

</mosaic_0001>

<llo_original>
// kernel: tpu_custom_call.1
$region0: #{tpu_custom_call.1}
  #allocation0 [shape = 'u32[]', space=smem, size = 0x4, offset = 0x4, fixed_abs, tag = 'smem constant byte address 0x4 - core index']
  #allocation1 [shape = 'u32[72,128]{1,0:T(1,128)}', space=vmem, size = 0x9000, scoped, tag = 'internal scratch']
  %s0 = inlined_call_operand.hbm [shape: f32[8,128], index: 0, kind: input, shape index: {}]
  %s1 = inlined_call_operand.hbm [shape: f32[8,128], index: 1, kind: output, shape index: {}]
  %s2 = sld [smem:[#allocation0]]
  $region18: #{tpu_custom_call.1} parent=0
    _
  %s4 = ssub.s32 1, %s2
  %s5 = scalar_select 0, %s4, %s2
  $region1: #{tpu_custom_call.1} parent=0
    #allocation2 [shape = 'u8[4096]{0}', space=vmem, size = 0x1000, scoped, tag = 'input window, operand 0, single buffered']
    #allocation3 [shape = 's32[1]{0}', space=sflag, size = 0x4, scoped, tag = 'scoped memory for tpu_custom_call.1']
    #allocation4 [shape = 's32[1]{0}', space=sflag, size = 0x4, scoped, tag = 'scoped memory for tpu_custom_call.1']
    #allocation5 [shape = 'u8[4096]{0}', space=vmem, size = 0x1000, scoped, tag = 'output window, operand 0, single buffered']
    %6 = vsyncpa [#allocation3], 0
    %7 = vsyncpa [#allocation4], 0
    // Predicated region
    $region2: #{tpu_custom_call.1} parent=1 // pred_check
      _
    $region3: #{tpu_custom_call.1} parent=1 // pred_check_branch
      %9 = sbr.rel (0) target = $region5
    $region4: #{tpu_custom_call.1} parent=1 // pred_region
      %11 = vsyncadd [#allocation3], 0
      %s13 = sshll.u32 %s0, 4
      %s14 = int_to_ptr.hbm [resolvable:$true] %s13
      %s15 = sshll.u32 [#allocation2], 4
      %s16 = int_to_ptr.vmem [resolvable:$true] %s15
      %18 = dma.hbm_to_vmem [thread:$0]  %s14, 128, %s16, [#allocation3]
    $region5: #{tpu_custom_call.1} parent=1 // pred_fallthru
      _
    // Predicated region
    $region6: #{tpu_custom_call.1} parent=1 // pred_check
      _
    $region7: #{tpu_custom_call.1} parent=1 // pred_check_branch
      %20 = sbr.rel (0) target = $region9
    $region8: #{tpu_custom_call.1} parent=1 // pred_region
      %22 = dma.done [#allocation3], 128
    $region9: #{tpu_custom_call.1} parent=1 // pred_fallthru
      _
    %v23 = vld [vmem:[#allocation2] sm:$0xff]
    %24 = vrot.lane.b32.xlu0 %v23, 1
    %v25 = vpop.permute.xlu0 %24
    %26 = vst [vmem:[#allocation5] sm:$0xff] %v25
    // Predicated region
    $region10: #{tpu_custom_call.1} parent=1 // pred_check
      _
    $region11: #{tpu_custom_call.1} parent=1 // pred_check_branch
      %28 = sbr.rel (0) target = $region13
    $region12: #{tpu_custom_call.1} parent=1 // pred_region
      %30 = vsyncadd [#allocation4], 0
      %s32 = sshll.u32 [#allocation5], 4
      %s33 = int_to_ptr.vmem [resolvable:$true] %s32
      %s34 = sshll.u32 %s1, 4
      %s35 = int_to_ptr.hbm [resolvable:$true] %s34
      %37 = dma.vmem_to_hbm [thread:$0]  %s33, 128, %s35, [#allocation4]
    $region13: #{tpu_custom_call.1} parent=1 // pred_fallthru
      _
    // Predicated region
    $region14: #{tpu_custom_call.1} parent=1 // pred_check
      _
    $region15: #{tpu_custom_call.1} parent=1 // pred_check_branch
      %39 = sbr.rel (0) target = $region17
    $region16: #{tpu_custom_call.1} parent=1 // pred_region
      %41 = dma.done [#allocation4], 128
    $region17: #{tpu_custom_call.1} parent=1 // pred_fallthru
      _
    %42 = vsyncpa [#allocation3], 1
    %43 = vsyncpa [#allocation4], 1

</llo_original>
